<compile_context>
chip_gen: v7x
topology: tpu7x:2x2x1
jax: 0.10.0
libtpu: 0.0.40
codegen_flags: <defaults>
</compile_context>

<pallas_src>
import jax
import jax.numpy as jnp
from jax.experimental import pallas as pl
from jax.experimental.pallas import tpu as pltpu


_TARGET_BLOCK_BYTES = 6 * 1024 * 1024     # per-input HBM->VMEM block (~6 MiB)
_CHUNK_BLOCK_BYTES = 512 * 1024           # cap on live f32 intermediates within one block
_SMALL_INPUT_BYTES = 64 * 1024            # below this, plain XLA beats pallas_call fixed overhead


def _row_alignment(dtype) -> int:
    # Sublane packing granularity: f32 -> 8, bf16/f16 -> 16, int8/fp8 -> 32.
    itemsize = jnp.dtype(dtype).itemsize
    return {1: 32, 2: 16}.get(itemsize, 8)


def _choose_tiles(batch, dim, itemsize, row_align, target_block_bytes, chunk_block_bytes):
    """Returns (block_rows, chunk_rows) or None if row-only tiling cannot fit (too-wide D)."""
    bytes_per_row = max(dim * itemsize, 1)
    rows_budget = target_block_bytes // bytes_per_row

    if rows_budget >= batch:
        # Whole array fits in one block.
        block_rows = batch
        chunk_rows = (chunk_block_bytes // max(dim * 4, 1)) // row_align * row_align
        if chunk_rows < row_align or block_rows % chunk_rows != 0:
            chunk_rows = block_rows
        return block_rows, min(chunk_rows, block_rows)

    if rows_budget < row_align:
        # Even one sublane-aligned row group exceeds the block budget.
        return None

    chunk_rows = max(row_align,
                     (chunk_block_bytes // max(dim * 4, 1)) // row_align * row_align)
    chunk_rows = min(chunk_rows, (rows_budget // row_align) * row_align)
    block_rows = (rows_budget // chunk_rows) * chunk_rows   # multiple of chunk_rows
    return block_rows, chunk_rows


def _make_mse_partial_kernel(batch, dim, block_rows, chunk_rows, num_parallel,
                             inner_steps, needs_mask):
    chunks = block_rows // chunk_rows
    unroll = chunks <= 8

    def kernel(a_ref, b_ref, o_ref, acc_ref):
        p = pl.program_id(0)
        i = pl.program_id(1)

        @pl.when(i == 0)
        def _():
            acc_ref[...] = jnp.zeros_like(acc_ref)

        def add_chunk(start_row, a, b, masked):
            # Hot path: diff + square on the VPU; explicit f32 cast (v5e has no bf16 VPU path).
            d = a.astype(jnp.float32) - b.astype(jnp.float32)
            sq = d * d
            if masked:
                # Zero contributions from padded rows of the ragged last block.
                base = (p * inner_steps + i) * block_rows + start_row
                rows = jax.lax.broadcasted_iota(jnp.int32, sq.shape, 0) + base
                sq = jnp.where(rows < batch, sq, 0.0)
            acc_ref[...] += sq

        def accumulate(masked):
            if chunks == 1:
                add_chunk(0, a_ref[...], b_ref[...], masked)
            else:
                # Chunk loop over sublane-aligned slices of the Refs: keeps the live f32
                # intermediates to one (chunk_rows, dim) slab instead of a full block.
                def body(c, carry):
                    start = pl.multiple_of(c * chunk_rows, chunk_rows)
                    add_chunk(start,
                              a_ref[pl.ds(start, chunk_rows), :],
                              b_ref[pl.ds(start, chunk_rows), :],
                              masked)
                    return carry
                jax.lax.fori_loop(0, chunks, body, None, unroll=unroll)

        if needs_mask:
            # Only the single block straddling the batch boundary pays the mask VALU cost.
            is_tail = jnp.logical_and(p == num_parallel - 1, i == inner_steps - 1)

            @pl.when(is_tail)
            def _():
                accumulate(True)

            @pl.when(jnp.logical_not(is_tail))
            def _():
                accumulate(False)
        else:
            accumulate(False)

        @pl.when(i == inner_steps - 1)
        def _():
            # One cross-lane (XLU) reduce per parallel slice, not per grid step.
            o_ref[0, 0] = jnp.sum(acc_ref[...])

    return kernel


def thought_consistency_loss(true_next_state: jax.Array,
                             perturbed_next_state: jax.Array,
                             *,
                             use_pallas: bool | None = None,
                             target_block_bytes: int = _TARGET_BLOCK_BYTES,
                             chunk_block_bytes: int = _CHUNK_BLOCK_BYTES) -> jax.Array:
    """MSE loss (mean over all elements), matching F.mse_loss(reduction='mean')."""
    assert true_next_state.shape == perturbed_next_state.shape
    assert true_next_state.ndim == 2
    B, D = true_next_state.shape
    itemsize = jnp.dtype(true_next_state.dtype).itemsize
    total_bytes = B * D * itemsize

    def _xla():
        a = true_next_state.astype(jnp.float32)
        b = perturbed_next_state.astype(jnp.float32)
        return jnp.mean((a - b) ** 2)

    if use_pallas is None:
        use_pallas = total_bytes >= _SMALL_INPUT_BYTES
    if not use_pallas:
        return _xla()

    row_align = _row_alignment(true_next_state.dtype)
    tiles = _choose_tiles(B, D, itemsize, row_align, target_block_bytes, chunk_block_bytes)
    if tiles is None:
        # TODO(synk): tile very wide state_dim along the lane axis (multiples of 128) with an
        # extra reduction grid dimension instead of falling back to XLA.
        return _xla()
    block_rows, chunk_rows = tiles

    nb = pl.cdiv(B, block_rows)                      # number of row blocks
    # Parallel split must divide nb exactly: no clamped virtual blocks, no redundant HBM reads.
    num_parallel = 2 if (nb >= 2 and nb % 2 == 0) else 1
    inner_steps = nb // num_parallel
    needs_mask = (nb * block_rows != B)              # only the global last block is ragged

    def in_map(p, i, inner=inner_steps):
        return (p * inner + i, 0)

    kernel = _make_mse_partial_kernel(B, D, block_rows, chunk_rows, num_parallel,
                                      inner_steps, needs_mask)

    partials = pl.pallas_call(
        kernel,
        out_shape=jax.ShapeDtypeStruct((num_parallel, 1), jnp.float32),
        grid_spec=pltpu.PrefetchScalarGridSpec(
            num_scalar_prefetch=0,
            grid=(num_parallel, inner_steps),
            in_specs=[
                pl.BlockSpec((block_rows, D), in_map),
                pl.BlockSpec((block_rows, D), in_map),
            ],
            out_specs=pl.BlockSpec((1, 1), lambda p, i: (p, 0),
                                   memory_space=pltpu.SMEM),
            scratch_shapes=[pltpu.VMEM((chunk_rows, D), jnp.float32)],
        ),
        compiler_params=pltpu.CompilerParams(
            dimension_semantics=("parallel", "arbitrary"),
            vmem_limit_bytes=48 * 1024 * 1024,
        ),
        cost_estimate=pl.CostEstimate(
            flops=3 * B * D,
            transcendentals=0,
            bytes_accessed=2 * B * D * itemsize + 4 * num_parallel),
    )(true_next_state, perturbed_next_state)

    total = partials[0, 0] if num_parallel == 1 else jnp.sum(partials)
    return total / (B * D)


if __name__ == "__main__":
    key = jax.random.PRNGKey(0)
    k1, k2, k3, k4, k5, k6 = jax.random.split(key, 6)

    def check(a, b, **kw):
        loss = jax.block_until_ready(thought_consistency_loss(a, b, use_pallas=True, **kw))
        ref = jnp.mean((a.astype(jnp.float32) - b.astype(jnp.float32)) ** 2)
        assert jnp.allclose(loss, ref, rtol=1e-5, atol=1e-6), (loss, ref)

    # 1) Small (batch, state_dim) matching the module contract: single-block path.
    batch, state_dim = 16, 128
    true_next_state = jax.random.normal(k1, (batch, state_dim), dtype=jnp.float32)
    perturbed_next_state = true_next_state + 0.1 * jax.random.normal(
        k2, (batch, state_dim), dtype=jnp.float32)
    check(true_next_state, perturbed_next_state)

    # 2) Ragged batch + chunk-looped accumulate (tiny budgets force the paths):
    #    70 rows -> 32-row blocks (3 blocks, last partial), 8-row chunks (4 chunks/block).
    a2 = jax.random.normal(k3, (70, 128), dtype=jnp.float32)
    b2 = a2 + 0.05 * jax.random.normal(k4, (70, 128), dtype=jnp.float32)
    check(a2, b2, target_block_bytes=32 * 128 * 4, chunk_block_bytes=8 * 128 * 4)

    # 3) Even block count -> 2-way parallel partials (megacore path), no masking needed.
    a3 = jax.random.normal(k5, (64, 128), dtype=jnp.float32)
    b3 = a3 + 0.05 * jax.random.normal(k6, (64, 128), dtype=jnp.float32)
    check(a3, b3, target_block_bytes=16 * 128 * 4)

    print("KERNEL_OK")
</pallas_src>

<mosaic_0001>
module attributes {stable_mosaic.version = 11 : i64} {
  func.func @kernel(%arg0: i32, %arg1: i32, %arg2: memref<16x128xf32, #tpu.memory_space<vmem>>, %arg3: memref<16x128xf32, #tpu.memory_space<vmem>>, %arg4: memref<1x1xf32, #tpu.memory_space<smem>>, %arg5: memref<16x128xf32, #tpu.memory_space<vmem>>) attributes {dimension_semantics = [#tpu.dimension_semantics<parallel>, #tpu.dimension_semantics<arbitrary>], iteration_bounds = array<i64: 1, 1>, scalar_prefetch = 0 : i64, scratch_operands = 1 : i64, tpu.core_type = #tpu.core_type<tc>, window_params = [{transform_indices = @transform_0, window_bounds = array<i64: 16, 128>}, {transform_indices = @transform_1, window_bounds = array<i64: 16, 128>}, {transform_indices = @transform_2, window_bounds = array<i64: 1, 1>}]} {
    %c0_i32 = arith.constant 0 : i32
    %0 = arith.cmpi eq, %arg1, %c0_i32 : i32
    %1 = arith.extui %0 : i1 to i32
    %c0_i32_0 = arith.constant 0 : i32
    %2 = arith.cmpi ne, %1, %c0_i32_0 : i32
    scf.if %2 {
      %cst = arith.constant 0.000000e+00 : f32
      %13 = vector.broadcast %cst : f32 to vector<16x128xf32>
      %c0_10 = arith.constant 0 : index
      %c0_11 = arith.constant 0 : index
      %14 = vector.load %arg5[%c0_10, %c0_11] : memref<16x128xf32, #tpu.memory_space<vmem>>, vector<16x128xf32>
      tpu.vector_store %arg5[%c0_10, %c0_11], %13 {strides = array<i32>} : memref<16x128xf32, #tpu.memory_space<vmem>>, vector<16x128xf32>,
    } else {
    }
    %c0 = arith.constant 0 : index
    %c0_1 = arith.constant 0 : index
    %3 = vector.load %arg2[%c0, %c0_1] : memref<16x128xf32, #tpu.memory_space<vmem>>, vector<16x128xf32>
    %c0_2 = arith.constant 0 : index
    %c0_3 = arith.constant 0 : index
    %4 = vector.load %arg3[%c0_2, %c0_3] : memref<16x128xf32, #tpu.memory_space<vmem>>, vector<16x128xf32>
    %5 = arith.subf %3, %4 : vector<16x128xf32>
    %6 = arith.mulf %5, %5 : vector<16x128xf32>
    %c0_4 = arith.constant 0 : index
    %c0_5 = arith.constant 0 : index
    %7 = vector.load %arg5[%c0_4, %c0_5] : memref<16x128xf32, #tpu.memory_space<vmem>>, vector<16x128xf32>
    %8 = arith.addf %7, %6 : vector<16x128xf32>
    %c0_6 = arith.constant 0 : index
    %c0_7 = arith.constant 0 : index
    %9 = vector.load %arg5[%c0_6, %c0_7] : memref<16x128xf32, #tpu.memory_space<vmem>>, vector<16x128xf32>
    tpu.vector_store %arg5[%c0_6, %c0_7], %8 {strides = array<i32>} : memref<16x128xf32, #tpu.memory_space<vmem>>, vector<16x128xf32>,
    %c0_i32_8 = arith.constant 0 : i32
    %10 = arith.cmpi eq, %arg1, %c0_i32_8 : i32
    %11 = arith.extui %10 : i1 to i32
    %c0_i32_9 = arith.constant 0 : i32
    %12 = arith.cmpi ne, %11, %c0_i32_9 : i32
    scf.if %12 {
      %c0_10 = arith.constant 0 : index
      %c0_11 = arith.constant 0 : index
      %13 = vector.load %arg5[%c0_10, %c0_11] : memref<16x128xf32, #tpu.memory_space<vmem>>, vector<16x128xf32>
      %14 = vector.shape_cast %13 : vector<16x128xf32> to vector<1x16x128xf32>
      %cst = arith.constant dense<0.000000e+00> : vector<1xf32>
      %15 = vector.multi_reduction <add>, %14, %cst [1, 2] : vector<1x16x128xf32> to vector<1xf32>
      %16 = vector.shape_cast %15 : vector<1xf32> to vector<1x1x1xf32>
      %17 = vector.extract %16[0, 0, 0] : f32 from vector<1x1x1xf32>
      %c0_12 = arith.constant 0 : index
      %c0_13 = arith.constant 0 : index
      %18 = memref.load %arg4[%c0_12, %c0_13] : memref<1x1xf32, #tpu.memory_space<smem>>
      memref.store %17, %arg4[%c0_12, %c0_13] : memref<1x1xf32, #tpu.memory_space<smem>>
    } else {
    }
    return
  }
  func.func @transform_0(%arg0: i32, %arg1: i32) -> (i32, i32) {
    %c1_i32 = arith.constant 1 : i32
    %0 = arith.muli %arg0, %c1_i32 : i32
    %1 = arith.addi %0, %arg1 : i32
    %c0_i32 = arith.constant 0 : i32
    %c0_i32_0 = arith.constant 0 : i32
    return %1, %c0_i32 : i32, i32
  }
  func.func @transform_1(%arg0: i32, %arg1: i32) -> (i32, i32) {
    %c1_i32 = arith.constant 1 : i32
    %0 = arith.muli %arg0, %c1_i32 : i32
    %1 = arith.addi %0, %arg1 : i32
    %c0_i32 = arith.constant 0 : i32
    %c0_i32_0 = arith.constant 0 : i32
    return %1, %c0_i32 : i32, i32
  }
  func.func @transform_2(%arg0: i32, %arg1: i32) -> (i32, i32) {
    %c0_i32 = arith.constant 0 : i32
    %c0_i32_0 = arith.constant 0 : i32
    return %arg0, %c0_i32 : i32, i32
  }
}

</mosaic_0001>

<llo_original>
// kernel: tpu_custom_call.1
$region0: #{tpu_custom_call.1}
  #allocation0 [shape = 'u32[]', space=smem, size = 0x4, offset = 0x4, fixed_abs, tag = 'smem constant byte address 0x4 - core index']
  #allocation1 [shape = 'u32[144,128]{1,0:T(1,128)}', space=vmem, size = 0x12000, scoped, tag = 'internal scratch']
  #allocation2 [shape = 'f32[16,128]{1,0:T(8,128)}', space=vmem, size = 0x2000, scoped, tag = 'scratch operand']
  %s0 = inlined_call_operand.hbm [shape: f32[16,128], index: 0, kind: input, shape index: {}]
  %s1 = inlined_call_operand.hbm [shape: f32[16,128], index: 1, kind: input, shape index: {}]
  %s2 = inlined_call_operand.hbm [shape: f32[1,1], index: 2, kind: output, shape index: {}]
  %s3 = sld [smem:[#allocation0]]
  $region34: #{tpu_custom_call.1} parent=0
    _
  %s5 = ssub.s32 1, %s3
  %s6 = scalar_select 0, %s5, %s3
  $region1: #{tpu_custom_call.1} parent=0
    #allocation3 [shape = 'u8[8192]{0}', space=vmem, size = 0x2000, scoped, tag = 'input window, operand 0, single buffered']
    #allocation4 [shape = 's32[1]{0}', space=sflag, size = 0x4, scoped, tag = 'scoped memory for tpu_custom_call.1']
    #allocation5 [shape = 's32[1]{0}', space=sflag, size = 0x4, scoped, tag = 'scoped memory for tpu_custom_call.1']
    #allocation6 [shape = 'u8[8192]{0}', space=vmem, size = 0x2000, scoped, tag = 'input window, operand 1, single buffered']
    #allocation7 [shape = 's32[1]{0}', space=sflag, size = 0x4, scoped, tag = 'scoped memory for tpu_custom_call.1']
    #allocation8 [shape = 'u8[512]{0}', space=smem, size = 0x200, scoped, tag = 'output window, operand 0, single buffered']
    %7 = vsyncpa [#allocation4], 0
    %8 = vsyncpa [#allocation7], 0
    %9 = vsyncpa [#allocation5], 0
    // Predicated region
    $region2: #{tpu_custom_call.1} parent=1 // pred_check
      _
    $region3: #{tpu_custom_call.1} parent=1 // pred_check_branch
      %11 = sbr.rel (0) target = $region5
    $region4: #{tpu_custom_call.1} parent=1 // pred_region
      %s12 = sadd.s32 0, 0
      %s13 = smul.u32 2, %s12
      %s15 = ssub.s32 256, 256
      %16 = vsyncadd [#allocation4], %s15
      %s17 = smul.addr %s13, 128
      %s18 = scalar_lea.hbm %s0, %s17
      %s19 = sshll.u32 [#allocation3], 4
      %s20 = int_to_ptr.vmem [resolvable:$true] %s19
      %25 = dma.hbm_to_vmem [thread:$0]  %s18, 256, %s20, [#allocation4], 128, 128, 8
    $region5: #{tpu_custom_call.1} parent=1 // pred_fallthru
      _
    // Predicated region
    $region6: #{tpu_custom_call.1} parent=1 // pred_check
      _
    $region7: #{tpu_custom_call.1} parent=1 // pred_check_branch
      %27 = sbr.rel (0) target = $region9
    $region8: #{tpu_custom_call.1} parent=1 // pred_region
      %s28 = sadd.s32 0, 0
      %s29 = smul.u32 2, %s28
      %s31 = ssub.s32 256, 256
      %32 = vsyncadd [#allocation7], %s31
      %s33 = smul.addr %s29, 128
      %s34 = scalar_lea.hbm %s1, %s33
      %s35 = sshll.u32 [#allocation6], 4
      %s36 = int_to_ptr.vmem [resolvable:$true] %s35
      %41 = dma.hbm_to_vmem [thread:$0]  %s34, 256, %s36, [#allocation7], 128, 128, 8
    $region9: #{tpu_custom_call.1} parent=1 // pred_fallthru
      _
    // Predicated region
    $region10: #{tpu_custom_call.1} parent=1 // pred_check
      _
    $region11: #{tpu_custom_call.1} parent=1 // pred_check_branch
      %43 = sbr.rel (0) target = $region13
    $region12: #{tpu_custom_call.1} parent=1 // pred_region
      %44 = dma.done [#allocation4], 256
    $region13: #{tpu_custom_call.1} parent=1 // pred_fallthru
      _
    // Predicated region
    $region14: #{tpu_custom_call.1} parent=1 // pred_check
      _
    $region15: #{tpu_custom_call.1} parent=1 // pred_check_branch
      %46 = sbr.rel (0) target = $region17
    $region16: #{tpu_custom_call.1} parent=1 // pred_region
      %47 = dma.done [#allocation7], 256
    $region17: #{tpu_custom_call.1} parent=1 // pred_fallthru
      _
    %s48 = sadd.s32 0, 0
    %s49 = smul.u32 2, %s48
    %s50 = sadd.s32 0, 0
    %s51 = smul.u32 2, %s50
    %p52 = scmp.eq.s32.totalorder 0, 0
    // Predicated region
    $region18: #{tpu_custom_call.1} parent=1 // pred_check
      %p53 = pneg %p52
    $region19: #{tpu_custom_call.1} parent=1 // pred_check_branch
      %55 = sbr.rel (%p53) target = $region21
    $region20: #{tpu_custom_call.1} parent=1 // pred_region
      %56 = vst [vmem:[#allocation2] sm:$0xff] 0.0
      %57 = vst [vmem:[#allocation2 + $0x8] sm:$0xff] 0.0
    $region21: #{tpu_custom_call.1} parent=1 // pred_fallthru
      _
    %v58 = vld [vmem:[#allocation3] sm:$0xff]
    %v59 = vld [vmem:[#allocation3 + $0x8] sm:$0xff]
    %v60 = vld [vmem:[#allocation6] sm:$0xff]
    %v61 = vld [vmem:[#allocation6 + $0x8] sm:$0xff]
    %v62 = vsub.f32 %v58, %v60
    %v63 = vsub.f32 %v59, %v61
    %v64 = vmul.f32 %v62, %v62
    %v65 = vmul.f32 %v63, %v63
    %v66 = vld [vmem:[#allocation2] sm:$0xff]
    %v67 = vld [vmem:[#allocation2 + $0x8] sm:$0xff]
    %v68 = vadd.f32 %v66, %v64
    %v69 = vadd.f32 %v67, %v65
    %70 = vst [vmem:[#allocation2] sm:$0xff] %v68
    %71 = vst [vmem:[#allocation2 + $0x8] sm:$0xff] %v69
    // Predicated region
    $region22: #{tpu_custom_call.1} parent=1 // pred_check
      %p72 = pneg %p52
    $region23: #{tpu_custom_call.1} parent=1 // pred_check_branch
      %74 = sbr.rel (%p72) target = $region25
    $region24: #{tpu_custom_call.1} parent=1 // pred_region
      %v75 = vld [vmem:[#allocation2] sm:$0xff]
      %v76 = vld [vmem:[#allocation2 + $0x8] sm:$0xff]
      %v77 = vadd.f32 %v75, %v76
      %78 = vadd.xlane.f32.xlu0 %v77
      %v79 = vpop.xlane.xlu0 %78
      %v80 = vrot.slane %v79, 4
      %v81 = vadd.f32 %v79, %v80
      %v82 = vrot.slane %v81, 2
      %v83 = vadd.f32 %v81, %v82
      %v84 = vrot.slane %v83, 1
      %v85 = vadd.f32 %v83, %v84
      %s86 = vtos %v85
      %s87 = scalar_lea.smem [#allocation8], 0
      %88 = sst [smem:[%s87]] %s86
    $region25: #{tpu_custom_call.1} parent=1 // pred_fallthru
      _
    // Predicated region
    $region26: #{tpu_custom_call.1} parent=1 // pred_check
      _
    $region27: #{tpu_custom_call.1} parent=1 // pred_check_branch
      %90 = sbr.rel (0) target = $region29
    $region28: #{tpu_custom_call.1} parent=1 // pred_region
      %s92 = ssub.s32 16, 16
      %93 = vsyncadd [#allocation5], %s92
      %96 = dma.smem_to_hbm [#allocation8], 16, %s2, [#allocation5]
    $region29: #{tpu_custom_call.1} parent=1 // pred_fallthru
      _
    // Predicated region
    $region30: #{tpu_custom_call.1} parent=1 // pred_check
      _
    $region31: #{tpu_custom_call.1} parent=1 // pred_check_branch
      %98 = sbr.rel (0) target = $region33
    $region32: #{tpu_custom_call.1} parent=1 // pred_region
      %99 = dma.done [#allocation5], 16
    $region33: #{tpu_custom_call.1} parent=1 // pred_fallthru
      _
    %100 = sfence
    %101 = vsyncpa [#allocation4], 1
    %102 = vsyncpa [#allocation7], 1
    %103 = vsyncpa [#allocation5], 1

</llo_original>
